<compile_context>
chip_gen: v7x
topology: tpu7x:2x2x1
jax: 0.10.0
libtpu: 0.0.40
codegen_flags: <defaults>
</compile_context>

<pallas_src>
import functools

import jax
import jax.numpy as jnp
from jax.experimental import pallas as pl
from jax.experimental.pallas import tpu as pltpu


def _round_up(x, m):
    return ((x + m - 1) // m) * m


def _tile(dim, target):
    """Tile size + padded extent for one array axis: either the full axis
    (always a legal Pallas block) or a multiple-of-8 tile with zero padding."""
    if dim <= target:
        return dim, dim
    t = max(8, (target // 8) * 8)
    return t, _round_up(dim, t)


def _vmem_limit_bytes():
    # ~3/4 of physical VMEM: 96 MiB on v5e/v6e (128 MiB), 48 MiB on v7x (64 MiB).
    try:
        cap = int(pltpu.get_tpu_info().vmem_capacity_bytes)
        return max(32 * 1024 * 1024, min(cap * 3 // 4, 96 * 1024 * 1024))
    except Exception:
        return 64 * 1024 * 1024


# ---------------------------------------------------------------------------
# Kernels
# ---------------------------------------------------------------------------

def _proj_kernel(x_ref, w_ref, b_ref, o_ref, *, apply_tanh):
    """(TB,H) summary rows @ (H,tc) weight tile + bias (+ tanh) -> (TB,tc)."""
    out = jnp.dot(x_ref[...], w_ref[...], preferred_element_type=jnp.float32)
    out = out + b_ref[...]
    if apply_tanh:
        out = jnp.tanh(out)
    o_ref[...] = out.astype(o_ref.dtype)


def _mean_proj_kernel(x_ref, w_ref, b_ref, o_ref, acc_ref, *, inv_s, apply_tanh):
    """grid = (batch tile, class tile, seq tile).  The seq axis is a reduction:
    partial sums accumulate into acc_ref; the projection runs on the last tile."""
    s = pl.program_id(2)

    @pl.when(s == 0)
    def _init():
        acc_ref[...] = jnp.zeros_like(acc_ref)

    acc_ref[...] += jnp.sum(x_ref[...].astype(jnp.float32), axis=1)

    @pl.when(s == pl.num_programs(2) - 1)
    def _finalize():
        summary = acc_ref[...] * inv_s
        out = jnp.dot(summary.astype(w_ref.dtype), w_ref[...],
                      preferred_element_type=jnp.float32) + b_ref[...]
        if apply_tanh:
            out = jnp.tanh(out)
        o_ref[...] = out.astype(o_ref.dtype)


def _mean_kernel(x_ref, o_ref, acc_ref, *, inv_s, apply_tanh):
    """Mean over the sequence, no projection.  grid = (batch tile, seq tile)."""
    s = pl.program_id(1)

    @pl.when(s == 0)
    def _init():
        acc_ref[...] = jnp.zeros_like(acc_ref)

    acc_ref[...] += jnp.sum(x_ref[...].astype(jnp.float32), axis=1)

    @pl.when(s == pl.num_programs(1) - 1)
    def _finalize():
        out = acc_ref[...] * inv_s
        if apply_tanh:
            out = jnp.tanh(out)
        o_ref[...] = out.astype(o_ref.dtype)


def _act_kernel(x_ref, o_ref, *, apply_tanh):
    """No-projection path: copy (optionally tanh) the already-gathered summary."""
    out = x_ref[...].astype(jnp.float32)
    if apply_tanh:
        out = jnp.tanh(out)
    o_ref[...] = out.astype(o_ref.dtype)


# ---------------------------------------------------------------------------
# Wrapper
# ---------------------------------------------------------------------------

def sequence_summary(hidden_states, params=None, *, summary_type="last",
                     cls_index=None, use_proj=True, activation="tanh",
                     batch_tile=256, class_tile=512, seq_tile=512):
    """hidden_states: (B, S, H) -> (B, num_classes) (or (B, H) if use_proj=False).

    params['w_summary'] is the pre-transposed (H, C) Linear weight,
    params['b_summary'] the (C,) bias.
    """
    B, S, H = (int(d) for d in hidden_states.shape)
    apply_tanh = (activation == "tanh")
    out_dtype = hidden_states.dtype
    itemsize = jnp.dtype(hidden_states.dtype).itemsize
    vmem_limit = _vmem_limit_bytes()

    # -- summary extraction ----------------------------------------------------
    # For 'last'/'first'/'cls_index' only one token row per batch is needed, so
    # the gather happens at the wrapper level (static slice / XLA row gather):
    # the kernel never sees the (B,S,H) slab.  'mean' keeps the reduction inside
    # the kernel (seq-tiled grid axis) so the resident block stays VMEM-bounded.
    if summary_type == "last":
        summ = hidden_states[:, S - 1, :]
    elif summary_type == "first":
        summ = hidden_states[:, 0, :]
    elif summary_type == "cls_index":
        if cls_index is None:
            ci = jnp.full((B,), S - 1, jnp.int32)        # module default: last token
        else:
            ci = jnp.clip(cls_index.reshape(B).astype(jnp.int32), 0, S - 1)
        # TODO(synk): this row-gather could be folded into the Pallas kernel via a
        # scalar-prefetched index_map / manual DMA gather; the XLA gather here
        # already reads only one H-row per batch from HBM.
        summ = jnp.take_along_axis(hidden_states, ci[:, None, None], axis=1)[:, 0, :]
    elif summary_type == "mean":
        summ = None
    else:
        raise NotImplementedError(summary_type)          # 'attn' unimplemented upstream too

    # -- batch / sequence tiling -------------------------------------------------
    if summary_type == "mean":
        tb_t, ts_t = batch_tile, seq_tile
        budget = 16 * 1024 * 1024                        # double-buffered x-block budget
        while ts_t > 8 and 2 * min(tb_t, B) * min(ts_t, S) * H * itemsize > budget:
            ts_t //= 2
        while tb_t > 8 and 2 * min(tb_t, B) * min(ts_t, S) * H * itemsize > budget:
            tb_t //= 2
        TB, B_pad = _tile(B, tb_t)
        TS, S_pad = _tile(S, ts_t)
        x = hidden_states
        if B_pad != B or S_pad != S:
            x = jnp.zeros((B_pad, S_pad, H), x.dtype).at[:B, :S].set(x)
    else:
        TB, B_pad = _tile(B, batch_tile)
        if B_pad != B:
            summ = jnp.zeros((B_pad, H), summ.dtype).at[:B].set(summ)

    # -- projection path ----------------------------------------------------------
    if use_proj:
        w = params["w_summary"]
        b = params["b_summary"]
        C = int(w.shape[1])
        tc = min(class_tile, _round_up(C, 128))
        w_itemsize = jnp.dtype(w.dtype).itemsize
        while tc > 128 and 2 * H * tc * w_itemsize > 16 * 1024 * 1024:
            tc //= 2                                     # bound double-buffered W tile
        c_pad = _round_up(C, tc)
        # pad classes to a lane-dense multiple of 128 (sliced off at the end)
        w_p = w if c_pad == C else jnp.zeros((H, c_pad), w.dtype).at[:, :C].set(w)
        b_p = jnp.zeros((1, c_pad), jnp.float32).at[:, :C].set(
            b.reshape(1, C).astype(jnp.float32))

        cost = pl.CostEstimate(
            flops=int(2 * B_pad * H * c_pad),
            transcendentals=int(B_pad * c_pad) if apply_tanh else 0,
            bytes_accessed=int((B_pad * (S if summary_type == "mean" else 1) * H
                                + H * c_pad) * itemsize
                               + (c_pad + B_pad * c_pad) * 4),
        )

        if summary_type == "mean":
            out = pl.pallas_call(
                functools.partial(_mean_proj_kernel, inv_s=1.0 / S,
                                  apply_tanh=apply_tanh),
                out_shape=jax.ShapeDtypeStruct((B_pad, c_pad), out_dtype),
                grid_spec=pltpu.PrefetchScalarGridSpec(
                    num_scalar_prefetch=0,
                    grid=(B_pad // TB, c_pad // tc, S_pad // TS),
                    in_specs=[
                        pl.BlockSpec((TB, TS, H), lambda i, j, s: (i, s, 0)),
                        pl.BlockSpec((H, tc), lambda i, j, s: (0, j)),
                        pl.BlockSpec((1, tc), lambda i, j, s: (0, j)),
                    ],
                    out_specs=pl.BlockSpec((TB, tc), lambda i, j, s: (i, j)),
                    scratch_shapes=[pltpu.VMEM((TB, H), jnp.float32)],
                ),
                compiler_params=pltpu.CompilerParams(
                    dimension_semantics=("parallel", "arbitrary", "arbitrary"),
                    vmem_limit_bytes=vmem_limit,
                ),
                cost_estimate=cost,
            )(x, w_p, b_p)
        else:
            out = pl.pallas_call(
                functools.partial(_proj_kernel, apply_tanh=apply_tanh),
                out_shape=jax.ShapeDtypeStruct((B_pad, c_pad), out_dtype),
                grid_spec=pltpu.PrefetchScalarGridSpec(
                    num_scalar_prefetch=0,
                    grid=(B_pad // TB, c_pad // tc),
                    in_specs=[
                        # summary rows: block index independent of j -> stays resident
                        pl.BlockSpec((TB, H), lambda i, j: (i, 0)),
                        # weight tile: constant block index when C fits one tile
                        pl.BlockSpec((H, tc), lambda i, j: (0, j)),
                        pl.BlockSpec((1, tc), lambda i, j: (0, j)),
                    ],
                    out_specs=pl.BlockSpec((TB, tc), lambda i, j: (i, j)),
                ),
                compiler_params=pltpu.CompilerParams(
                    dimension_semantics=("parallel", "arbitrary"),
                    vmem_limit_bytes=vmem_limit,
                ),
                cost_estimate=cost,
            )(summ, w_p, b_p)
        return out[:B, :C]

    # -- no projection (nn.Identity summary): output = summary (+ optional tanh) --
    if summary_type == "mean":
        out = pl.pallas_call(
            functools.partial(_mean_kernel, inv_s=1.0 / S, apply_tanh=apply_tanh),
            out_shape=jax.ShapeDtypeStruct((B_pad, H), out_dtype),
            grid_spec=pltpu.PrefetchScalarGridSpec(
                num_scalar_prefetch=0,
                grid=(B_pad // TB, S_pad // TS),
                in_specs=[pl.BlockSpec((TB, TS, H), lambda i, s: (i, s, 0))],
                out_specs=pl.BlockSpec((TB, H), lambda i, s: (i, 0)),
                scratch_shapes=[pltpu.VMEM((TB, H), jnp.float32)],
            ),
            compiler_params=pltpu.CompilerParams(
                dimension_semantics=("parallel", "arbitrary"),
                vmem_limit_bytes=vmem_limit,
            ),
        )(x)
    else:
        out = pl.pallas_call(
            functools.partial(_act_kernel, apply_tanh=apply_tanh),
            out_shape=jax.ShapeDtypeStruct((B_pad, H), out_dtype),
            grid_spec=pltpu.PrefetchScalarGridSpec(
                num_scalar_prefetch=0,
                grid=(B_pad // TB,),
                in_specs=[pl.BlockSpec((TB, H), lambda i: (i, 0))],
                out_specs=pl.BlockSpec((TB, H), lambda i: (i, 0)),
            ),
            compiler_params=pltpu.CompilerParams(
                dimension_semantics=("parallel",),
                vmem_limit_bytes=vmem_limit,
            ),
        )(summ)
    return out[:B]


# ---------------------------------------------------------------------------
# Pure-JAX reference of SequenceSummary.forward (eval mode)
# ---------------------------------------------------------------------------

def _reference(hidden_states, params, *, summary_type, cls_index=None,
               use_proj=True, activation="tanh"):
    B, S, H = hidden_states.shape
    if summary_type == "last":
        out = hidden_states[:, -1]
    elif summary_type == "first":
        out = hidden_states[:, 0]
    elif summary_type == "mean":
        out = hidden_states.mean(axis=1)
    elif summary_type == "cls_index":
        ci = (jnp.full((B,), S - 1, jnp.int32) if cls_index is None
              else cls_index.reshape(B).astype(jnp.int32))
        out = jnp.take_along_axis(hidden_states, ci[:, None, None], axis=1)[:, 0]
    else:
        raise NotImplementedError(summary_type)
    if use_proj:
        out = out @ params["w_summary"] + params["b_summary"]
    if activation == "tanh":
        out = jnp.tanh(out)
    return out


if __name__ == "__main__":
    # Small config consistent with the module: [bsz, seq_len, hidden_size],
    # summary_use_proj=True -> Linear(hidden_size, num_labels), tanh activation.
    B, S, H = 4, 8, 32
    NUM_LABELS = 10

    key = jax.random.PRNGKey(0)
    kx, kw, kb, kc = jax.random.split(key, 4)
    hidden_states = jax.random.normal(kx, (B, S, H), jnp.float32)
    params = {
        "w_summary": 0.05 * jax.random.normal(kw, (H, NUM_LABELS), jnp.float32),
        "b_summary": 0.01 * jax.random.normal(kb, (NUM_LABELS,), jnp.float32),
    }
    cls_index = jax.random.randint(kc, (B,), 0, S, jnp.int32)

    # projection + tanh, every summary type
    cases = [("last", None), ("first", None), ("mean", None),
             ("cls_index", cls_index), ("cls_index", None)]
    for st, ci in cases:
        out = jax.block_until_ready(
            sequence_summary(hidden_states, params, summary_type=st,
                             cls_index=ci, use_proj=True, activation="tanh"))
        ref = _reference(hidden_states, params, summary_type=st, cls_index=ci,
                         use_proj=True, activation="tanh")
        assert out.shape == (B, NUM_LABELS), (st, out.shape)
        assert jnp.allclose(out, ref, atol=1e-4, rtol=1e-4), \
            (st, float(jnp.max(jnp.abs(out - ref))))

    # no-projection paths (nn.Identity summary layer)
    out = jax.block_until_ready(
        sequence_summary(hidden_states, params, summary_type="last",
                         use_proj=False, activation=None))
    ref = _reference(hidden_states, params, summary_type="last",
                     use_proj=False, activation=None)
    assert out.shape == (B, H)
    assert jnp.allclose(out, ref, atol=1e-5, rtol=1e-5), \
        float(jnp.max(jnp.abs(out - ref)))

    out = jax.block_until_ready(
        sequence_summary(hidden_states, params, summary_type="mean",
                         use_proj=False, activation="tanh"))
    ref = _reference(hidden_states, params, summary_type="mean",
                     use_proj=False, activation="tanh")
    assert out.shape == (B, H)
    assert jnp.allclose(out, ref, atol=1e-4, rtol=1e-4), \
        float(jnp.max(jnp.abs(out - ref)))

    # bf16 inputs (halves HBM traffic; f32 accumulation inside the kernel)
    hs_bf16 = hidden_states.astype(jnp.bfloat16)
    params_bf16 = {"w_summary": params["w_summary"].astype(jnp.bfloat16),
                   "b_summary": params["b_summary"]}
    out = jax.block_until_ready(
        sequence_summary(hs_bf16, params_bf16, summary_type="last",
                         use_proj=True, activation="tanh"))
    ref = _reference(hidden_states, params, summary_type="last",
                     use_proj=True, activation="tanh")
    assert out.shape == (B, NUM_LABELS)
    assert jnp.allclose(out.astype(jnp.float32), ref, atol=3e-2), \
        float(jnp.max(jnp.abs(out.astype(jnp.float32) - ref)))

    print("KERNEL_OK")
</pallas_src>

<mosaic_0001>
module attributes {stable_mosaic.version = 11 : i64} {
  func.func @_proj_kernel(%arg0: i32, %arg1: i32, %arg2: memref<4x32xf32, #tpu.memory_space<vmem>>, %arg3: memref<32x128xf32, #tpu.memory_space<vmem>>, %arg4: memref<1x128xf32, #tpu.memory_space<vmem>>, %arg5: memref<4x128xf32, #tpu.memory_space<vmem>>) attributes {dimension_semantics = [#tpu.dimension_semantics<parallel>, #tpu.dimension_semantics<arbitrary>], iteration_bounds = array<i64: 1, 1>, scalar_prefetch = 0 : i64, scratch_operands = 0 : i64, tpu.core_type = #tpu.core_type<tc>, window_params = [{transform_indices = @transform_0, window_bounds = array<i64: 4, 32>}, {transform_indices = @transform_1, window_bounds = array<i64: 32, 128>}, {transform_indices = @transform_2, window_bounds = array<i64: 1, 128>}, {transform_indices = @transform_3, window_bounds = array<i64: 4, 128>}]} {
    %c0 = arith.constant 0 : index
    %c0_0 = arith.constant 0 : index
    %0 = vector.load %arg2[%c0, %c0_0] : memref<4x32xf32, #tpu.memory_space<vmem>>, vector<4x32xf32>
    %c0_1 = arith.constant 0 : index
    %c0_2 = arith.constant 0 : index
    %1 = vector.load %arg3[%c0_1, %c0_2] : memref<32x128xf32, #tpu.memory_space<vmem>>, vector<32x128xf32>
    %cst = arith.constant dense<0.000000e+00> : vector<4x128xf32>
    %2 = tpu.matmul %0, %1, %cst {dimension_numbers = #tpu.dot_dimension_numbers<[1], [0], [0], [1], [0, 0, 1, 1], [], []>} : vector<4x32xf32>, vector<32x128xf32>, vector<4x128xf32> -> vector<4x128xf32>
    %c0_3 = arith.constant 0 : index
    %c0_4 = arith.constant 0 : index
    %3 = vector.load %arg4[%c0_3, %c0_4] : memref<1x128xf32, #tpu.memory_space<vmem>>, vector<1x128xf32>
    %4 = vector.broadcast %3 : vector<1x128xf32> to vector<4x128xf32>
    %5 = arith.addf %2, %4 : vector<4x128xf32>
    %6 = math.tanh %5 : vector<4x128xf32>
    %c0_5 = arith.constant 0 : index
    %c0_6 = arith.constant 0 : index
    %7 = vector.load %arg5[%c0_5, %c0_6] : memref<4x128xf32, #tpu.memory_space<vmem>>, vector<4x128xf32>
    tpu.vector_store %arg5[%c0_5, %c0_6], %6 {strides = array<i32>} : memref<4x128xf32, #tpu.memory_space<vmem>>, vector<4x128xf32>,
    return
  }
  func.func @transform_0(%arg0: i32, %arg1: i32) -> (i32, i32) {
    %c0_i32 = arith.constant 0 : i32
    %c0_i32_0 = arith.constant 0 : i32
    return %arg0, %c0_i32 : i32, i32
  }
  func.func @transform_1(%arg0: i32, %arg1: i32) -> (i32, i32) {
    %c0_i32 = arith.constant 0 : i32
    %c0_i32_0 = arith.constant 0 : i32
    return %c0_i32, %arg1 : i32, i32
  }
  func.func @transform_2(%arg0: i32, %arg1: i32) -> (i32, i32) {
    %c0_i32 = arith.constant 0 : i32
    %c0_i32_0 = arith.constant 0 : i32
    return %c0_i32, %arg1 : i32, i32
  }
  func.func @transform_3(%arg0: i32, %arg1: i32) -> (i32, i32) {
    %c0_i32 = arith.constant 0 : i32
    return %arg0, %arg1 : i32, i32
  }
}

</mosaic_0001>

<llo_original>
// kernel: tpu_custom_call.1
$region0: #{tpu_custom_call.1}
  #allocation0 [shape = 'u32[]', space=smem, size = 0x4, offset = 0x4, fixed_abs, tag = 'smem constant byte address 0x4 - core index']
  #allocation1 [shape = 'u32[144,128]{1,0:T(1,128)}', space=vmem, size = 0x12000, scoped, tag = 'internal scratch']
  %s0 = inlined_call_operand.hbm [shape: f32[4,32], index: 0, kind: input, shape index: {}]
  %s1 = inlined_call_operand.hbm [shape: f32[32,128], index: 1, kind: input, shape index: {}]
  %s2 = inlined_call_operand.hbm [shape: f32[1,128], index: 2, kind: input, shape index: {}]
  %s3 = inlined_call_operand.hbm [shape: f32[4,128], index: 3, kind: output, shape index: {}]
  %s4 = sld [smem:[#allocation0]]
  $region34: #{tpu_custom_call.1} parent=0
    _
  %s6 = ssub.s32 1, %s4
  %s7 = scalar_select 0, %s6, %s4
  $region1: #{tpu_custom_call.1} parent=0
    #allocation2 [shape = 'u8[2048]{0}', space=vmem, size = 0x800, scoped, tag = 'input window, operand 0, single buffered']
    #allocation3 [shape = 's32[1]{0}', space=sflag, size = 0x4, scoped, tag = 'scoped memory for tpu_custom_call.1']
    #allocation4 [shape = 's32[1]{0}', space=sflag, size = 0x4, scoped, tag = 'scoped memory for tpu_custom_call.1']
    #allocation5 [shape = 'u8[16384]{0}', space=vmem, size = 0x4000, scoped, tag = 'input window, operand 1, single buffered']
    #allocation6 [shape = 's32[1]{0}', space=sflag, size = 0x4, scoped, tag = 'scoped memory for tpu_custom_call.1']
    #allocation7 [shape = 'u8[512]{0}', space=vmem, size = 0x400, scoped, tag = 'input window, operand 2, single buffered']
    #allocation8 [shape = 'u8[2048]{0}', space=vmem, size = 0x800, scoped, tag = 'output window, operand 0, single buffered']
    %8 = vsyncpa [#allocation3], 0
    %9 = vsyncpa [#allocation6], 0
    %10 = vsyncpa [#allocation4], 0
    // Predicated region
    $region2: #{tpu_custom_call.1} parent=1 // pred_check
      _
    $region3: #{tpu_custom_call.1} parent=1 // pred_check_branch
      %12 = sbr.rel (0) target = $region5
    $region4: #{tpu_custom_call.1} parent=1 // pred_region
      %s14 = ssub.s32 64, 64
      %15 = vsyncadd [#allocation3], %s14
      %s17 = sshll.u32 [#allocation2], 4
      %s18 = int_to_ptr.vmem [resolvable:$true] %s17
      %20 = dma.hbm_to_vmem [thread:$0]  %s0, 64, %s18, [#allocation3]
    $region5: #{tpu_custom_call.1} parent=1 // pred_fallthru
      _
    // Predicated region
    $region6: #{tpu_custom_call.1} parent=1 // pred_check
      _
    $region7: #{tpu_custom_call.1} parent=1 // pred_check_branch
      %22 = sbr.rel (0) target = $region9
    $region8: #{tpu_custom_call.1} parent=1 // pred_region
      %s24 = ssub.s32 512, 512
      %25 = vsyncadd [#allocation6], %s24
      %s26 = sshll.u32 [#allocation5], 4
      %s27 = int_to_ptr.vmem [resolvable:$true] %s26
      %32 = dma.hbm_to_vmem [thread:$0]  %s1, 512, %s27, [#allocation6], 128, 128, 8
    $region9: #{tpu_custom_call.1} parent=1 // pred_fallthru
      _
    // Predicated region
    $region10: #{tpu_custom_call.1} parent=1 // pred_check
      _
    $region11: #{tpu_custom_call.1} parent=1 // pred_check_branch
      %34 = sbr.rel (0) target = $region13
    $region12: #{tpu_custom_call.1} parent=1 // pred_region
      %s36 = ssub.s32 16, 16
      %37 = vsyncadd [#allocation6], %s36
      %s39 = sshll.u32 [#allocation7], 4
      %s40 = int_to_ptr.vmem [resolvable:$true] %s39
      %42 = dma.hbm_to_vmem [thread:$0]  %s2, 16, %s40, [#allocation6]
    $region13: #{tpu_custom_call.1} parent=1 // pred_fallthru
      _
    // Predicated region
    $region14: #{tpu_custom_call.1} parent=1 // pred_check
      _
    $region15: #{tpu_custom_call.1} parent=1 // pred_check_branch
      %44 = sbr.rel (0) target = $region17
    $region16: #{tpu_custom_call.1} parent=1 // pred_region
      %45 = dma.done [#allocation3], 64
    $region17: #{tpu_custom_call.1} parent=1 // pred_fallthru
      _
    // Predicated region
    $region18: #{tpu_custom_call.1} parent=1 // pred_check
      _
    $region19: #{tpu_custom_call.1} parent=1 // pred_check_branch
      %47 = sbr.rel (0) target = $region21
    $region20: #{tpu_custom_call.1} parent=1 // pred_region
      %48 = dma.done [#allocation6], 512
    $region21: #{tpu_custom_call.1} parent=1 // pred_fallthru
      _
    // Predicated region
    $region22: #{tpu_custom_call.1} parent=1 // pred_check
      _
    $region23: #{tpu_custom_call.1} parent=1 // pred_check_branch
      %50 = sbr.rel (0) target = $region25
    $region24: #{tpu_custom_call.1} parent=1 // pred_region
      %51 = dma.done [#allocation6], 16
    $region25: #{tpu_custom_call.1} parent=1 // pred_fallthru
      _
    %v52 = vld [vmem:[#allocation2] sm:$0xf]
    %v53 = vld [vmem:[#allocation5] sm:$0xff]
    %v54 = vld [vmem:[#allocation5 + $0x8] sm:$0xff]
    %v55 = vld [vmem:[#allocation5 + $0x10] sm:$0xff]
    %v56 = vld [vmem:[#allocation5 + $0x18] sm:$0xff]
    %v57 = vld [vmem:[#allocation7] sm:$0x1]
    %v59 = vlaneseq
    %v60 = vshrl.u32 %v59, 7
    %v61 = vsub.s32 0, %v60
    %v62 = vrot.slane %v57, %v61
    %vm64 = vcmask 261120
    %v66 = vsel %vm64, %v52, 0
    %68 = vmatprep.subr.mxu0 0.0
    %69 = vmatpush1.msra.mxu0 %v53
    %70 = vmatprep.subr.mxu0 0.0
    %71 = vmatpush1.msra.mxu0 %v54
    %72 = vmatprep.subr.mxu0 0.0
    %73 = vmatpush1.msra.mxu0 %v55
    %74 = vmatprep.subr.mxu0 0.0
    %75 = vmatpush1.msra.mxu0 %v56
    %76 = vmatprep.subr.mxu0 0.0
    %77 = vmatpush1.msra.mxu0 0.0
    %78 = vmatprep.subr.mxu0 0.0
    %79 = vmatpush1.msra.mxu0 0.0
    %80 = vmatprep.subr.mxu0 0.0
    %81 = vmatpush1.msra.mxu0 0.0
    %82 = vmatprep.subr.mxu0 0.0
    %83 = vmatpush1.msra.mxu0 0.0
    %84 = vmatprep.subr.mxu0 0.0
    %85 = vmatpush1.msra.mxu0 0.0
    %86 = vmatprep.subr.mxu0 0.0
    %87 = vmatpush1.msra.mxu0 0.0
    %88 = vmatprep.subr.mxu0 0.0
    %89 = vmatpush1.msra.mxu0 0.0
    %90 = vmatprep.subr.mxu0 0.0
    %91 = vmatpush1.msra.mxu0 0.0
    %92 = vmatprep.subr.mxu0 0.0
    %93 = vmatpush1.msra.mxu0 0.0
    %94 = vmatprep.subr.mxu0 0.0
    %95 = vmatpush1.msra.mxu0 0.0
    %96 = vmatprep.subr.mxu0 0.0
    %97 = vmatpush1.msra.mxu0 0.0
    %98 = vmatprep.subr.mxu0 0.0
    %99 = vmatpush1.msra.mxu0 0.0
    %100 = vmatprep.subr.mxu0 0.0
    %101 = vmatpush1.msra.mxu0 0.0
    %102 = vmatprep.subr.mxu0 0.0
    %103 = vmatpush1.msra.mxu0 0.0
    %104 = vmatprep.subr.mxu0 0.0
    %105 = vmatpush1.msra.mxu0 0.0
    %106 = vmatprep.subr.mxu0 0.0
    %107 = vmatpush1.msra.mxu0 0.0
    %108 = vmatprep.subr.mxu0 0.0
    %109 = vmatpush1.msra.mxu0 0.0
    %110 = vmatprep.subr.mxu0 0.0
    %111 = vmatpush1.msra.mxu0 0.0
    %112 = vmatprep.subr.mxu0 0.0
    %113 = vmatpush1.msra.mxu0 0.0
    %114 = vmatprep.subr.mxu0 0.0
    %115 = vmatpush1.msra.mxu0 0.0
    %116 = vmatprep.subr.mxu0 0.0
    %117 = vmatpush1.msra.mxu0 0.0
    %118 = vmatprep.subr.mxu0 0.0
    %119 = vmatpush1.msra.mxu0 0.0
    %120 = vmatprep.subr.mxu0 0.0
    %121 = vmatpush1.msra.mxu0 0.0
    %122 = vmatprep.subr.mxu0 0.0
    %123 = vmatpush1.msra.mxu0 0.0
    %124 = vmatprep.subr.mxu0 0.0
    %125 = vmatpush1.msra.mxu0 0.0
    %126 = vmatprep.subr.mxu0 0.0
    %127 = vmatpush1.msra.mxu0 0.0
    %128 = vmatprep.subr.mxu0 0.0
    %129 = vmatpush1.msra.mxu0 0.0
    %130 = vmatprep.subr.mxu0 0.0
    %131 = vmatpush1.msra.mxu0 0.0
    %132 = vmatprep.mubr.f32.mxu0 0.0
    %133 = vmatmul.mubr.f32.gmra.mrb[0].mxu0 %v66
    %v134 = vpop.f32.mrb[0].mxu0
    %v135 = vadd.f32 %v62, %v134
    %v136 = vpop.f32.mrb[0].mxu0
    %137 = vdwg.mxu0
    %v138 = vtanh.pop %v135
    %139 = vst [vmem:[#allocation8] sm:$0xf] %v138
    // Predicated region
    $region26: #{tpu_custom_call.1} parent=1 // pred_check
      _
    $region27: #{tpu_custom_call.1} parent=1 // pred_check_branch
      %141 = sbr.rel (0) target = $region29
    $region28: #{tpu_custom_call.1} parent=1 // pred_region
      %s143 = ssub.s32 64, 64
      %144 = vsyncadd [#allocation4], %s143
      %s146 = sshll.u32 [#allocation8], 4
      %s147 = int_to_ptr.vmem [resolvable:$true] %s146
      %149 = dma.vmem_to_hbm [thread:$0]  %s147, 64, %s3, [#allocation4]
    $region29: #{tpu_custom_call.1} parent=1 // pred_fallthru
      _
    // Predicated region
    $region30: #{tpu_custom_call.1} parent=1 // pred_check
      _
    $region31: #{tpu_custom_call.1} parent=1 // pred_check_branch
      %151 = sbr.rel (0) target = $region33
    $region32: #{tpu_custom_call.1} parent=1 // pred_region
      %152 = dma.done [#allocation4], 64
    $region33: #{tpu_custom_call.1} parent=1 // pred_fallthru
      _
    %153 = vsyncpa [#allocation3], 1
    %154 = vsyncpa [#allocation6], 1
    %155 = vsyncpa [#allocation4], 1

</llo_original>
